<compile_context>
chip_gen: v5e
topology: v5e:2x2
jax: 0.10.0
libtpu: 0.0.40
codegen_flags: <defaults>
</compile_context>

<pallas_src>
import functools

import jax
import jax.numpy as jnp
from jax.experimental import pallas as pl
from jax.experimental.pallas import tpu as pltpu

K = 7          # conv kernel size
PAD = K // 2   # padding = 3


# --------------------------------------------------------------------------
# Kernel 1: lane-dense channel mean / max reduction, accumulating directly
# into the resident output block (row 0 = sum -> mean, row 1 = max).
# --------------------------------------------------------------------------
def _channel_reduce_kernel(x_ref, red_ref, *, num_channels, c_tile, mask_tail):
    # x_ref:   (Ct, HWt)  one channel tile, lane-dense over a spatial tile
    # red_ref: (2, HWt)   VMEM-resident across the c axis (same block index)
    c = pl.program_id(2)
    hw = red_ref.shape[1]

    @pl.when(c == 0)
    def _init():
        red_ref[0:1, :] = jnp.zeros((1, hw), red_ref.dtype)
        red_ref[1:2, :] = jnp.full((1, hw), -jnp.inf, red_ref.dtype)

    x = x_ref[...]                       # native dtype; no whole-tile upcast
    if mask_tail:
        # Last channel tile may extend past C (grid = cdiv(C, Ct)); mask it.
        row = jax.lax.broadcasted_iota(jnp.int32, x.shape, 0)
        valid = row < (num_channels - c * c_tile)
        x_sum_in = jnp.where(valid, x, jnp.zeros((), x.dtype))
        x_max_in = jnp.where(valid, x, jnp.array(-jnp.inf, x.dtype))
    else:
        x_sum_in = x
        x_max_in = x

    # Sum accumulates in f32 (cast fused into the reduction); max stays in the
    # native dtype and only the (1, HWt) row is upcast when combining.
    red_ref[0:1, :] += jnp.sum(x_sum_in.astype(jnp.float32), axis=0,
                               keepdims=True)
    red_ref[1:2, :] = jnp.maximum(
        red_ref[1:2, :],
        jnp.max(x_max_in, axis=0, keepdims=True).astype(red_ref.dtype))

    @pl.when(c == pl.num_programs(2) - 1)
    def _finalize():
        red_ref[0:1, :] = red_ref[0:1, :] * (1.0 / num_channels)


# --------------------------------------------------------------------------
# Kernel 2: 7x7 conv (2 -> 1 channels) over [avg, max] + sigmoid, batched.
# --------------------------------------------------------------------------
def _conv_sigmoid_kernel(red_ref, w_ref, o_ref):
    # red_ref: (Bt, 2, H, W) f32 reduced maps
    # w_ref:   (2*K*K,)      flattened conv weights in SMEM (order [ch, kh, kw])
    # o_ref:   (Bt, 1, H, W) output block
    Bt, _, H, W = red_ref.shape

    red = red_ref[...].astype(jnp.float32)                      # (Bt, 2, H, W)

    # Zero-pad the tiny maps in-register (negligible vs. padding full x).
    zrow = jnp.zeros((Bt, 2, PAD, W), jnp.float32)
    tall = jnp.concatenate([zrow, red, zrow], axis=2)            # (Bt,2,Hp,W)
    zcol = jnp.zeros((Bt, 2, H + 2 * PAD, PAD), jnp.float32)
    padded = jnp.concatenate([zcol, tall, zcol], axis=3)         # (Bt,2,Hp,Wp)

    avg_p = padded[:, 0]                                         # (Bt, Hp, Wp)
    max_p = padded[:, 1]

    acc = jnp.zeros((Bt, H, W), jnp.float32)
    for kw in range(K):
        # Hoist the lane (width) shift out of the kh loop: one lane slice per
        # kw per map, only sublane-offset slices inside the MAC loop.
        a_kw = avg_p[:, :, kw:kw + W]                            # (Bt, Hp, W)
        m_kw = max_p[:, :, kw:kw + W]
        for kh in range(K):
            wa = w_ref[0 * K * K + kh * K + kw]                  # scalar (SMEM)
            wm = w_ref[1 * K * K + kh * K + kw]
            acc = acc + wa * a_kw[:, kh:kh + H, :] + wm * m_kw[:, kh:kh + H, :]

    o_ref[...] = jax.nn.sigmoid(acc)[:, None].astype(o_ref.dtype)


# --------------------------------------------------------------------------
# Tile pickers.
# --------------------------------------------------------------------------
def _pick_channel_tile(C, HWt, itemsize, buf_budget_bytes=8 << 20):
    """Channel tile whose single input buffer fits ~8 MiB (double-buffered =
    16 MiB), multiple of 8 (Mosaic block rule) or the full C.  Never falls
    back to whole-C when it would not fit: instead a tail tile is masked."""
    max_ct = max(1, buf_budget_bytes // max(1, HWt * itemsize))
    if C <= max_ct:
        return C
    ct = (max_ct // 8) * 8
    if ct < 8:
        ct = min(C, 8)   # degenerate (huge spatial): smallest legal tile
    return ct


def _pick_batch_tile(B, H, W, budget_bytes=4 << 20):
    """How many batch elements kernel 2 processes per grid step (divisor of B)."""
    per_b = 4 * (6 * (H + 2 * PAD) * (W + 2 * PAD) + 3 * H * W)  # rough VMEM
    bt = max(1, min(B, budget_bytes // max(1, per_b)))
    while B % bt != 0:
        bt -= 1
    return bt


# --------------------------------------------------------------------------
# Wrapper.
# --------------------------------------------------------------------------
def spatial_attention(x, conv_w):
    """x: (B, C, H, W); conv_w: (1, 2, 7, 7)  ->  (B, 1, H, W) attention map."""
    B, C, H, W = x.shape
    HW = H * W
    itemsize = jnp.dtype(x.dtype).itemsize

    # Small-batch spatial split (v7x dual TensorCore); lane-aligned tiles only.
    n_hw = 2 if (B <= 2 and HW % 256 == 0) else 1
    HWt = HW // n_hw

    Ct = _pick_channel_tile(C, HWt, itemsize)
    n_c = -(-C // Ct)
    mask_tail = (C % Ct) != 0

    # ---- kernel 1: channel mean / max, lane-dense, C-tiled -----------------
    x_flat = x.reshape(B, C, HW)                 # free reshape of contiguous x

    red = pl.pallas_call(
        functools.partial(_channel_reduce_kernel, num_channels=C,
                          c_tile=Ct, mask_tail=mask_tail),
        out_shape=jax.ShapeDtypeStruct((B, 2, HW), jnp.float32),
        grid_spec=pltpu.PrefetchScalarGridSpec(
            num_scalar_prefetch=0,
            grid=(B, n_hw, n_c),
            in_specs=[
                pl.BlockSpec((None, Ct, HWt), lambda b, s, c: (b, c, s)),
            ],
            out_specs=pl.BlockSpec((None, 2, HWt), lambda b, s, c: (b, 0, s)),
        ),
        compiler_params=pltpu.CompilerParams(
            dimension_semantics=("parallel", "parallel", "arbitrary"),
            vmem_limit_bytes=48 * 1024 * 1024,
        ),
        cost_estimate=pl.CostEstimate(
            flops=2 * B * C * HW,
            transcendentals=0,
            bytes_accessed=B * C * HW * itemsize + B * 2 * HW * 4,
        ),
    )(x_flat)

    # ---- kernel 2: 7x7 conv over tiny reduced maps + sigmoid ---------------
    red_2d = red.reshape(B, 2, H, W)             # free reshape, tiny array
    w_flat = conv_w.reshape(-1).astype(jnp.float32)   # (2*K*K,)

    Bt = _pick_batch_tile(B, H, W)

    return pl.pallas_call(
        _conv_sigmoid_kernel,
        out_shape=jax.ShapeDtypeStruct((B, 1, H, W), x.dtype),
        grid_spec=pltpu.PrefetchScalarGridSpec(
            num_scalar_prefetch=0,
            grid=(B // Bt,),
            in_specs=[
                pl.BlockSpec((Bt, 2, H, W), lambda b: (b, 0, 0, 0)),
                pl.BlockSpec(memory_space=pltpu.MemorySpace.SMEM),
            ],
            out_specs=pl.BlockSpec((Bt, 1, H, W), lambda b: (b, 0, 0, 0)),
        ),
        compiler_params=pltpu.CompilerParams(
            dimension_semantics=("parallel",),
        ),
    )(red_2d, w_flat)


# --------------------------------------------------------------------------
# Pure-JAX reference matching the PyTorch forward.
# --------------------------------------------------------------------------
def reference(x, conv_w):
    avg = jnp.mean(x, axis=1, keepdims=True)
    mx = jnp.max(x, axis=1, keepdims=True)
    cat = jnp.concatenate([avg, mx], axis=1)           # (B, 2, H, W)
    y = jax.lax.conv_general_dilated(
        cat, conv_w,
        window_strides=(1, 1),
        padding=((PAD, PAD), (PAD, PAD)),
        dimension_numbers=("NCHW", "OIHW", "NCHW"),
    )
    return jax.nn.sigmoid(y)


if __name__ == "__main__":
    key = jax.random.PRNGKey(0)
    kx, kw = jax.random.split(key)

    B, C, H, W = 2, 4, 16, 16
    x = jax.random.normal(kx, (B, C, H, W), dtype=jnp.float32)
    # deterministic synthetic conv weight (matches nn.Conv2d(2, 1, 7, bias=False))
    conv_w = 0.1 * jax.random.normal(kw, (1, 2, K, K), dtype=jnp.float32)

    out = spatial_attention(x, conv_w)
    out = jax.block_until_ready(out)

    ref = jax.block_until_ready(reference(x, conv_w))
    assert out.shape == (B, 1, H, W)
    assert jnp.allclose(out, ref, atol=1e-5, rtol=1e-5), (
        float(jnp.max(jnp.abs(out - ref))))

    print("KERNEL_OK")
</pallas_src>

<mosaic_0001>
module attributes {stable_mosaic.version = 11 : i64} {
  func.func @_channel_reduce_kernel(%arg0: i32, %arg1: i32, %arg2: i32, %arg3: memref<1x4x128xf32, #tpu.memory_space<vmem>>, %arg4: memref<1x2x128xf32, #tpu.memory_space<vmem>>) attributes {dimension_semantics = [#tpu.dimension_semantics<parallel>, #tpu.dimension_semantics<parallel>, #tpu.dimension_semantics<arbitrary>], iteration_bounds = array<i64: 2, 2, 1>, scalar_prefetch = 0 : i64, scratch_operands = 0 : i64, tpu.core_type = #tpu.core_type<tc>, window_params = [{transform_indices = @transform_0, window_bounds = array<i64: 1, 4, 128>}, {transform_indices = @transform_1, window_bounds = array<i64: 1, 2, 128>}]} {
    %c0_i32 = arith.constant 0 : i32
    %0 = arith.cmpi eq, %arg2, %c0_i32 : i32
    %1 = arith.extui %0 : i1 to i32
    %c0_i32_0 = arith.constant 0 : i32
    %2 = arith.cmpi ne, %1, %c0_i32_0 : i32
    scf.if %2 {
      %cst_17 = arith.constant 0.000000e+00 : f32
      %24 = vector.broadcast %cst_17 : f32 to vector<1x128xf32>
      %c0_18 = arith.constant 0 : index
      %c0_19 = arith.constant 0 : index
      %c0_20 = arith.constant 0 : index
      %25 = vector.load %arg4[%c0_18, %c0_19, %c0_20] : memref<1x2x128xf32, #tpu.memory_space<vmem>>, vector<1x1x128xf32>
      %26 = vector.shape_cast %25 : vector<1x1x128xf32> to vector<1x128xf32>
      %27 = vector.shape_cast %24 : vector<1x128xf32> to vector<1x1x128xf32>
      tpu.vector_store %arg4[%c0_18, %c0_19, %c0_20], %27 {strides = array<i32>} : memref<1x2x128xf32, #tpu.memory_space<vmem>>, vector<1x1x128xf32>,
      %cst_21 = arith.constant 0xFF800000 : f32
      %28 = vector.broadcast %cst_21 : f32 to vector<1x128xf32>
      %c0_22 = arith.constant 0 : index
      %c1_23 = arith.constant 1 : index
      %c0_24 = arith.constant 0 : index
      %29 = vector.load %arg4[%c0_22, %c1_23, %c0_24] : memref<1x2x128xf32, #tpu.memory_space<vmem>>, vector<1x1x128xf32>
      %30 = vector.shape_cast %29 : vector<1x1x128xf32> to vector<1x128xf32>
      %31 = vector.shape_cast %28 : vector<1x128xf32> to vector<1x1x128xf32>
      tpu.vector_store %arg4[%c0_22, %c1_23, %c0_24], %31 {strides = array<i32>} : memref<1x2x128xf32, #tpu.memory_space<vmem>>, vector<1x1x128xf32>,
    } else {
    }
    %c0 = arith.constant 0 : index
    %c0_1 = arith.constant 0 : index
    %c0_2 = arith.constant 0 : index
    %3 = vector.load %arg3[%c0, %c0_1, %c0_2] : memref<1x4x128xf32, #tpu.memory_space<vmem>>, vector<1x4x128xf32>
    %4 = vector.shape_cast %3 : vector<1x4x128xf32> to vector<4x128xf32>
    %c0_3 = arith.constant 0 : index
    %c0_4 = arith.constant 0 : index
    %c0_5 = arith.constant 0 : index
    %5 = vector.load %arg4[%c0_3, %c0_4, %c0_5] : memref<1x2x128xf32, #tpu.memory_space<vmem>>, vector<1x1x128xf32>
    %6 = vector.shape_cast %5 : vector<1x1x128xf32> to vector<1x128xf32>
    %cst = arith.constant dense<0.000000e+00> : vector<128xf32>
    %7 = vector.multi_reduction <add>, %4, %cst [0] : vector<4x128xf32> to vector<128xf32>
    %8 = vector.shape_cast %7 : vector<128xf32> to vector<1x128xf32>
    %9 = arith.addf %6, %8 : vector<1x128xf32>
    %c0_6 = arith.constant 0 : index
    %c0_7 = arith.constant 0 : index
    %c0_8 = arith.constant 0 : index
    %10 = vector.load %arg4[%c0_6, %c0_7, %c0_8] : memref<1x2x128xf32, #tpu.memory_space<vmem>>, vector<1x1x128xf32>
    %11 = vector.shape_cast %10 : vector<1x1x128xf32> to vector<1x128xf32>
    %12 = vector.shape_cast %9 : vector<1x128xf32> to vector<1x1x128xf32>
    tpu.vector_store %arg4[%c0_6, %c0_7, %c0_8], %12 {strides = array<i32>} : memref<1x2x128xf32, #tpu.memory_space<vmem>>, vector<1x1x128xf32>,
    %c0_9 = arith.constant 0 : index
    %c1 = arith.constant 1 : index
    %c0_10 = arith.constant 0 : index
    %13 = vector.load %arg4[%c0_9, %c1, %c0_10] : memref<1x2x128xf32, #tpu.memory_space<vmem>>, vector<1x1x128xf32>
    %14 = vector.shape_cast %13 : vector<1x1x128xf32> to vector<1x128xf32>
    %cst_11 = arith.constant dense<0xFF800000> : vector<128xf32>
    %15 = vector.multi_reduction <maximumf>, %4, %cst_11 [0] : vector<4x128xf32> to vector<128xf32>
    %16 = vector.shape_cast %15 : vector<128xf32> to vector<1x128xf32>
    %17 = arith.maximumf %14, %16 : vector<1x128xf32>
    %c0_12 = arith.constant 0 : index
    %c1_13 = arith.constant 1 : index
    %c0_14 = arith.constant 0 : index
    %18 = vector.load %arg4[%c0_12, %c1_13, %c0_14] : memref<1x2x128xf32, #tpu.memory_space<vmem>>, vector<1x1x128xf32>
    %19 = vector.shape_cast %18 : vector<1x1x128xf32> to vector<1x128xf32>
    %20 = vector.shape_cast %17 : vector<1x128xf32> to vector<1x1x128xf32>
    tpu.vector_store %arg4[%c0_12, %c1_13, %c0_14], %20 {strides = array<i32>} : memref<1x2x128xf32, #tpu.memory_space<vmem>>, vector<1x1x128xf32>,
    %c0_i32_15 = arith.constant 0 : i32
    %21 = arith.cmpi eq, %arg2, %c0_i32_15 : i32
    %22 = arith.extui %21 : i1 to i32
    %c0_i32_16 = arith.constant 0 : i32
    %23 = arith.cmpi ne, %22, %c0_i32_16 : i32
    scf.if %23 {
      %c0_17 = arith.constant 0 : index
      %c0_18 = arith.constant 0 : index
      %c0_19 = arith.constant 0 : index
      %24 = vector.load %arg4[%c0_17, %c0_18, %c0_19] : memref<1x2x128xf32, #tpu.memory_space<vmem>>, vector<1x1x128xf32>
      %25 = vector.shape_cast %24 : vector<1x1x128xf32> to vector<1x128xf32>
      %cst_20 = arith.constant 2.500000e-01 : f32
      %26 = vector.broadcast %cst_20 : f32 to vector<1x128xf32>
      %27 = arith.mulf %25, %26 : vector<1x128xf32>
      %c0_21 = arith.constant 0 : index
      %c0_22 = arith.constant 0 : index
      %c0_23 = arith.constant 0 : index
      %28 = vector.load %arg4[%c0_21, %c0_22, %c0_23] : memref<1x2x128xf32, #tpu.memory_space<vmem>>, vector<1x1x128xf32>
      %29 = vector.shape_cast %28 : vector<1x1x128xf32> to vector<1x128xf32>
      %30 = vector.shape_cast %27 : vector<1x128xf32> to vector<1x1x128xf32>
      tpu.vector_store %arg4[%c0_21, %c0_22, %c0_23], %30 {strides = array<i32>} : memref<1x2x128xf32, #tpu.memory_space<vmem>>, vector<1x1x128xf32>,
    } else {
    }
    return
  }
  func.func @transform_0(%arg0: i32, %arg1: i32, %arg2: i32) -> (i32, i32, i32) {
    %c0_i32 = arith.constant 0 : i32
    return %arg0, %arg2, %arg1 : i32, i32, i32
  }
  func.func @transform_1(%arg0: i32, %arg1: i32, %arg2: i32) -> (i32, i32, i32) {
    %c0_i32 = arith.constant 0 : i32
    %c0_i32_0 = arith.constant 0 : i32
    return %arg0, %c0_i32, %arg1 : i32, i32, i32
  }
}

</mosaic_0001>

<llo_original>
// kernel: tpu_custom_call.1
$region0: #{tpu_custom_call.1}
  #allocation0 [shape = 'u32[]', space=smem, size = 0x4, offset = 0x4, fixed_abs, tag = 'smem constant byte address 0x4 - core index']
  #allocation1 [shape = 'u32[72,128]{1,0:T(1,128)}', space=vmem, size = 0x9000, scoped, tag = 'internal scratch']
  %s0 = inlined_call_operand.hbm [shape: f32[2,4,256], index: 0, kind: input, shape index: {}]
  %s1 = inlined_call_operand.hbm [shape: f32[2,2,256], index: 1, kind: output, shape index: {}]
  %s2 = sld [smem:[#allocation0]]
  $region49: #{tpu_custom_call.1} parent=0
    _
  %s4 = ssub.s32 1, %s2
  %s5 = scalar_select 0, %s4, %s2
  $region1: #{tpu_custom_call.1} parent=0
    #allocation2 [shape = 'u8[4096]{0}', space=vmem, size = 0x1000, scoped, tag = 'input window, operand 0']
    #allocation3 [shape = 's32[2]{0}', space=sflag, size = 0x8, scoped, tag = 'scoped memory for tpu_custom_call.1']
    #allocation4 [shape = 's32[2]{0}', space=sflag, size = 0x8, scoped, tag = 'scoped memory for tpu_custom_call.1']
    #allocation5 [shape = 'u8[2048]{0}', space=vmem, size = 0x800, scoped, tag = 'output window, operand 0']
    %6 = vsyncpa [#allocation3], 0
    %s7 = scalar_lea.sflag [#allocation3], 1
    %8 = vsyncpa %s7, 0
    %9 = vsyncpa [#allocation4], 0
    %s10 = scalar_lea.sflag [#allocation4], 1
    %11 = vsyncpa %s10, 0
    loop: start=0, step=1, limit=6
    $region2: #{tpu_custom_call.1} parent=1 // loop_pre_header
      _
    $region3: #{tpu_custom_call.1} parent=1 // loop_header
      %s13 = sphi 0, %s17
      %p14 = scmp.ge.s32.totalorder %s13, 6
      %s20 = sphi 0, %s39
      %s21 = sphi 0, %s35
      %s22 = sphi 0, %s31
      %s23 = sphi 0, %s20
      %s24 = sphi 0, %s21
      %s25 = sphi 0, %s22
      %s26 = sphi 0, %s23
      %s27 = sphi 0, %s24
      %s28 = sphi 0, %s25
      %s46 = sphi 0, %s48
      %s49 = sphi 0, %s46
      %s50 = sphi 0, %s49
      %s66 = sphi 0, %s50
      %s74 = sphi 0, %s76
      %s77 = sphi 0, %s74
      %s78 = sphi 0, %s77
      %s94 = sphi 0, %s78
    $region4: #{tpu_custom_call.1} parent=1 // loop_header_branch
      %16 = sbr.rel (%p14) target = $region8
    $region5: #{tpu_custom_call.1} parent=1 // loop_body
      %s18 = ssub.s32 %s13, 1
      %s19 = ssub.s32 %s13, 2
      %s29 = sadd.s32 1, %s22
      %p30 = scmp.ge.s32.totalorder %s29, 1
      %s31 = scalar_select %p30, 0, %s29
      %s32 = sadd.s32 1, %s21
      %s33 = scalar_select %p30, %s32, %s21
      %p34 = scmp.ge.s32.totalorder %s33, 2
      %s35 = scalar_select %p34, 0, %s33
      %s36 = sadd.s32 1, %s20
      %s37 = scalar_select %p34, %s36, %s20
      %p38 = scmp.ge.s32.totalorder %s37, 2
      %s39 = scalar_select %p38, 0, %s37
      %s40 = ssub.s32 %s20, %s39
      %s41 = ssub.s32 %s22, %s31
      %s42 = sor.u32 %s40, %s41
      %s43 = ssub.s32 %s21, %s35
      %s44 = sor.u32 %s42, %s43
      %p45 = scmp.eq.s32.totalorder %s44, 0
      %s47 = sadd.s32 %s46, 1
      %s48 = scalar_select %p45, %s46, %s47
      %p51 = pneg %p45
      %p52 = scmp.eq.s32.totalorder %s13, 3
      %p53 = por %p51, %p52
      %p54 = scmp.ne.s32.totalorder %s46, %s49
      %p55 = scmp.eq.s32.totalorder %s13, 0
      %p56 = por %p54, %p55
      %p57 = scmp.ne.s32.totalorder %s46, %s49
      %p58 = scmp.eq.s32.totalorder %s18, 3
      %p59 = por %p57, %p58
      %p60 = scmp.ne.s32.totalorder %s49, %s50
      %p61 = scmp.eq.s32.totalorder %s18, 0
      %p62 = por %p60, %p61
      %p63 = scmp.ne.s32.totalorder %s49, %s50
      %p64 = scmp.eq.s32.totalorder %s19, 3
      %p65 = por %p63, %p64
      %p67 = scmp.ne.s32.totalorder %s50, %s66
      %p68 = scmp.eq.s32.totalorder %s19, 0
      %p69 = por %p67, %p68
      %s70 = ssub.s32 %s20, %s39
      %s71 = ssub.s32 %s21, %s35
      %s72 = sor.u32 %s70, %s71
      %p73 = scmp.eq.s32.totalorder %s72, 0
      %s75 = sadd.s32 %s74, 1
      %s76 = scalar_select %p73, %s74, %s75
      %p79 = pneg %p73
      %p80 = scmp.eq.s32.totalorder %s13, 3
      %p81 = por %p79, %p80
      %p82 = scmp.ne.s32.totalorder %s74, %s77
      %p83 = scmp.eq.s32.totalorder %s13, 0
      %p84 = por %p82, %p83
      %p85 = scmp.ne.s32.totalorder %s74, %s77
      %p86 = scmp.eq.s32.totalorder %s18, 3
      %p87 = por %p85, %p86
      %p88 = scmp.ne.s32.totalorder %s77, %s78
      %p89 = scmp.eq.s32.totalorder %s18, 0
      %p90 = por %p88, %p89
      %p91 = scmp.ne.s32.totalorder %s77, %s78
      %p92 = scmp.eq.s32.totalorder %s19, 3
      %p93 = por %p91, %p92
      %p95 = scmp.ne.s32.totalorder %s78, %s94
      %p96 = scmp.eq.s32.totalorder %s19, 0
      %p97 = por %p95, %p96
      %p98 = scmp.le.s32.totalorder 1, %s13
      %p99 = scmp.lt.s32.totalorder %s13, 5
      %p100 = pnand %p98, %p99
      %p101 = pneg %p100
      // Predicated region
      $region9: #{tpu_custom_call.1} parent=5 // pred_check
        _
      $region10: #{tpu_custom_call.1} parent=5 // pred_check_branch
        %103 = sbr.rel (%p100) target = $region12
      $region11: #{tpu_custom_call.1} parent=5 // pred_region
        %s104 = ssub.s32 %s13, 1
      $region12: #{tpu_custom_call.1} parent=5 // pred_fallthru
        _
      %p105 = scmp.lt.s32.totalorder %s13, 4
      // Predicated region
      $region13: #{tpu_custom_call.1} parent=5 // pred_check
        %p106 = pneg %p105
      $region14: #{tpu_custom_call.1} parent=5 // pred_check_branch
        %108 = sbr.rel (%p106) target = $region16
      $region15: #{tpu_custom_call.1} parent=5 // pred_region
        // Predicated region
        $region17: #{tpu_custom_call.1} parent=15 // pred_check
          %p109 = pneg %p56
        $region18: #{tpu_custom_call.1} parent=15 // pred_check_branch
          %111 = sbr.rel (%p109) target = $region20
        $region19: #{tpu_custom_call.1} parent=15 // pred_region
          %s112 = sand.u32 %s46, 1
          %s113 = scalar_lea.sflag [#allocation3], %s112
          %s114 = sand.u32 %s46, 1
          %s115 = smul.addr %s114, 4
          %s116 = scalar_lea.vmem [#allocation2], %s115
          %118 = vsyncadd %s113, 0
          %s119 = smul.addr %s22, 2
          %s120 = sadd.s32 %s21, %s119
          %s121 = smul.addr %s20, 2
          %s122 = sadd.s32 %s120, %s121
          %s123 = smul.addr %s122, 4
          %s124 = scalar_lea.hbm %s0, %s123
          %s126 = sshll.u32 %s124, 4
          %s127 = int_to_ptr.hbm [resolvable:$true] %s126
          %s128 = sshll.u32 %s116, 4
          %s129 = int_to_ptr.vmem [resolvable:$true] %s128
          %131 = dma.hbm_to_vmem [thread:$0]  %s127, 64, %s129, %s113
        $region20: #{tpu_custom_call.1} parent=15 // pred_fallthru
          _
      $region16: #{tpu_custom_call.1} parent=5 // pred_fallthru
        _
      %p132 = scmp.le.s32.totalorder 1, %s13
      %p133 = scmp.lt.s32.totalorder %s13, 5
      %p134 = pnand %p132, %p133
      %p135 = pneg %p134
      // Predicated region
      $region21: #{tpu_custom_call.1} parent=5 // pred_check
        _
      $region22: #{tpu_custom_call.1} parent=5 // pred_check_branch
        %137 = sbr.rel (%p134) target = $region24
      $region23: #{tpu_custom_call.1} parent=5 // pred_region
        %s138 = ssub.s32 %s13, 1
        %s139 = sand.u32 %s49, 1
        %s140 = scalar_lea.sflag [#allocation3], %s139
        %s141 = sand.u32 %s49, 1
        %s142 = smul.addr %s141, 4
        %s143 = scalar_lea.vmem [#allocation2], %s142
        // Predicated region
        $region25: #{tpu_custom_call.1} parent=23 // pred_check
          %p144 = pneg %p62
        $region26: #{tpu_custom_call.1} parent=23 // pred_check_branch
          %146 = sbr.rel (%p144) target = $region28
        $region27: #{tpu_custom_call.1} parent=23 // pred_region
          %148 = dma.done %s140, 64
        $region28: #{tpu_custom_call.1} parent=23 // pred_fallthru
          _
        %s149 = sand.u32 %s49, 1
        %s150 = scalar_lea.sflag [#allocation3], %s149
        %s151 = sand.u32 %s49, 1
        %s152 = smul.addr %s151, 4
        %s153 = scalar_lea.vmem [#allocation2], %s152
        %p154 = pneg %p62
        %p155 = pneg %p59
        %p156 = pneg %p90
        %p157 = pneg %p87
        %s158 = sand.u32 %s77, 1
        %s159 = scalar_lea.sflag [#allocation4], %s158
        %s160 = sand.u32 %s77, 1
        %s161 = smul.addr %s160, 2
        %s162 = scalar_lea.vmem [#allocation5], %s161
        %p163 = scmp.eq.s32.totalorder %s25, 0
        // Predicated region
        $region29: #{tpu_custom_call.1} parent=23 // pred_check
          %p164 = pneg %p163
        $region30: #{tpu_custom_call.1} parent=23 // pred_check_branch
          %166 = sbr.rel (%p164) target = $region32
        $region31: #{tpu_custom_call.1} parent=23 // pred_region
          %167 = vst [vmem:[%s162] sm:$0x1] 0.0
          %168 = vst [vmem:[%s162 + $0x1] sm:$0x1] -inf
        $region32: #{tpu_custom_call.1} parent=23 // pred_fallthru
          _
        %v169 = vld [vmem:[%s143] sm:$0xf]
        %v170 = vld [vmem:[%s162] sm:$0x1]
        %vm171 = vcmask 1043456
        %v172 = vsel %vm171, %v169, 0.0
        %v173 = vrot.slane %v172, 4
        %v174 = vadd.f32 %v172, %v173
        %v175 = vrot.slane %v174, 2
        %v176 = vadd.f32 %v174, %v175
        %v177 = vrot.slane %v176, 1
        %v178 = vadd.f32 %v176, %v177
        %v179 = vadd.f32 %v170, %v178
        %180 = vst [vmem:[%s162] sm:$0x1] %v179
        %v181 = vld [vmem:[%s162 + $0x1] sm:$0x1]
        %v182 = vsel %vm171, %v169, -inf
        %v183 = vrot.slane %v182, 4
        %v184 = vmax.f32 %v182, %v183
        %v185 = vrot.slane %v184, 2
        %v186 = vmax.f32 %v184, %v185
        %v187 = vrot.slane %v186, 1
        %v188 = vmax.f32 %v186, %v187
        %v189 = vmax.f32 %v181, %v188
        %190 = vst [vmem:[%s162 + $0x1] sm:$0x1] %v189
        // Predicated region
        $region33: #{tpu_custom_call.1} parent=23 // pred_check
          %p191 = pneg %p163
        $region34: #{tpu_custom_call.1} parent=23 // pred_check_branch
          %193 = sbr.rel (%p191) target = $region36
        $region35: #{tpu_custom_call.1} parent=23 // pred_region
          %v194 = vld [vmem:[%s162] sm:$0x1]
          %v195 = vmul.f32 %v194, 0.25
          %196 = vst [vmem:[%s162] sm:$0x1] %v195
        $region36: #{tpu_custom_call.1} parent=23 // pred_fallthru
          _
        %s197 = sand.u32 %s77, 1
        %s198 = scalar_lea.sflag [#allocation4], %s197
        %s199 = sand.u32 %s77, 1
        %s200 = smul.addr %s199, 2
        %s201 = scalar_lea.vmem [#allocation5], %s200
        // Predicated region
        $region37: #{tpu_custom_call.1} parent=23 // pred_check
          %p202 = pneg %p87
        $region38: #{tpu_custom_call.1} parent=23 // pred_check_branch
          %204 = sbr.rel (%p202) target = $region40
        $region39: #{tpu_custom_call.1} parent=23 // pred_region
          %206 = vsyncadd %s198, 0
          %s207 = smul.addr %s23, 2
          %s208 = sadd.s32 %s24, %s207
          %s209 = smul.addr %s208, 2
          %s210 = scalar_lea.hbm %s1, %s209
          %s212 = sshll.u32 %s201, 4
          %s213 = int_to_ptr.vmem [resolvable:$true] %s212
          %s214 = sshll.u32 %s210, 4
          %s215 = int_to_ptr.hbm [resolvable:$true] %s214
          %217 = dma.vmem_to_hbm [thread:$0]  %s213, 32, %s215, %s198
        $region40: #{tpu_custom_call.1} parent=23 // pred_fallthru
          _
      $region24: #{tpu_custom_call.1} parent=5 // pred_fallthru
        _
      %p218 = scmp.le.s32.totalorder 2, %s13
      // Predicated region
      $region41: #{tpu_custom_call.1} parent=5 // pred_check
        %p219 = pneg %p218
      $region42: #{tpu_custom_call.1} parent=5 // pred_check_branch
        %221 = sbr.rel (%p219) target = $region44
      $region43: #{tpu_custom_call.1} parent=5 // pred_region
        %s222 = ssub.s32 %s13, 2
        // Predicated region
        $region45: #{tpu_custom_call.1} parent=43 // pred_check
          %p223 = pneg %p93
        $region46: #{tpu_custom_call.1} parent=43 // pred_check_branch
          %225 = sbr.rel (%p223) target = $region48
        $region47: #{tpu_custom_call.1} parent=43 // pred_region
          %s226 = sand.u32 %s78, 1
          %s227 = scalar_lea.sflag [#allocation4], %s226
          %s228 = sand.u32 %s78, 1
          %s229 = smul.addr %s228, 2
          %s230 = scalar_lea.vmem [#allocation5], %s229
          %232 = dma.done %s227, 32
        $region48: #{tpu_custom_call.1} parent=43 // pred_fallthru
          _
      $region44: #{tpu_custom_call.1} parent=5 // pred_fallthru
        _
    $region6: #{tpu_custom_call.1} parent=1 // loop_footer
      %s17 = sadd.s32 1, %s13
    $region7: #{tpu_custom_call.1} parent=1 // loop_footer_branch
      %12 = sbr.rel target = $region3
    $region8: #{tpu_custom_call.1} parent=1 // loop_exit
      _
    %233 = vsyncpa [#allocation3], 1
    %s234 = scalar_lea.sflag [#allocation3], 1
    %235 = vsyncpa %s234, 1
    %236 = vsyncpa [#allocation4], 1
    %s237 = scalar_lea.sflag [#allocation4], 1
    %238 = vsyncpa %s237, 1

</llo_original>
